<compile_context>
chip_gen: v6e
topology: v6e:2x2x1
jax: 0.10.0
libtpu: 0.0.40
codegen_flags: <defaults>
</compile_context>

<pallas_src>
import functools

import jax
import jax.numpy as jnp
from jax import lax
from jax.experimental import pallas as pl
from jax.experimental.pallas import tpu as pltpu


def _round_up(x, m):
    return ((x + m - 1) // m) * m


# ---------------------------------------------------------------------------
# Kernel 1: fused QKV projection (softmax scale pre-folded into the Wq cols).
# Emits qkv as (B, 3*H, N, Dh) bf16 so the attention kernel can BlockSpec-slice
# per (head, tile) with full-last-dim blocks.
# ---------------------------------------------------------------------------
def _qkv_proj_kernel(x_ref, wqkv_ref, qkv_ref, *, three_h, dim_head):
    qkv = jnp.dot(x_ref[0], wqkv_ref[...],
                  preferred_element_type=jnp.float32)            # (tm, 3*H*Dh) f32
    qkv = qkv.astype(qkv_ref.dtype)                              # bf16, cast once
    for j in range(three_h):                                     # static unroll, stores only
        qkv_ref[0, j] = qkv[:, j * dim_head:(j + 1) * dim_head]


# ---------------------------------------------------------------------------
# Kernel 2: flash-style geometric attention.
# grid = (B, n_q_tiles, H, n_k_tiles)
# Online softmax over key tiles with deferred normalization.
# ---------------------------------------------------------------------------
def _flash_geom_attn_kernel(wdist_ref,              # (H,)        SMEM (scalar prefetch)
                            q_ref, k_ref, v_ref,    # (1,1,tq,Dh)/(1,1,tk,Dh) bf16
                            cq_ref, ckT_ref,        # (1,tq,3) / (1,3,tk)      f32
                            mrow_ref, mcol_ref,     # (1,1,tk) / (1,tq,1)      f32
                            feats_ref, wo_ref,      # (1,tq,D) f32 / (H,Dh,D)  bf16
                            out0_ref, out1_ref,     # (1,tq,D) f32 / (1,H,tq,3) f32
                            m_scr, l_scr, accv_scr, accc_scr,
                            *, heads):
    h = pl.program_id(2)
    ki = pl.program_id(3)
    nk = pl.num_programs(3)

    @pl.when((h == 0) & (ki == 0))
    def _init_residual():
        out0_ref[0] = feats_ref[0]            # residual; per-head o-proj accumulates below

    @pl.when(ki == 0)
    def _init_head():
        m_scr[...] = jnp.full_like(m_scr, -1e30)
        l_scr[...] = jnp.zeros_like(l_scr)
        accv_scr[...] = jnp.zeros_like(accv_scr)
        accc_scr[...] = jnp.zeros_like(accc_scr)

    q = q_ref[0, 0]                            # (tq, Dh) bf16, softmax scale pre-folded
    k = k_ref[0, 0]                            # (tk, Dh) bf16
    v = v_ref[0, 0]                            # (tk, Dh) bf16
    cq = cq_ref[0]                             # (tq, 3)  f32
    ckT = ckT_ref[0]                           # (3, tk)  f32
    mrow = mrow_ref[0]                         # (1, tk)  f32

    # (tq, tk) distance block, recomputed per tile (cheap K=3 matmul).
    sq_q = jnp.sum(cq * cq, axis=-1, keepdims=True)                   # (tq, 1)
    sq_k = jnp.sum(ckT * ckT, axis=0, keepdims=True)                  # (1, tk)
    cross = jnp.dot(cq, ckT, preferred_element_type=jnp.float32)      # (tq, tk)
    dist = jnp.sqrt(jnp.maximum(sq_q + sq_k - 2.0 * cross, 0.0))

    kbias = jnp.where(mrow > 0.5, 0.0, -1e9)                          # key-side mask bias
    s = lax.dot_general(q, k, (((1,), (1,)), ((), ())),
                        preferred_element_type=jnp.float32)           # (tq, tk)
    s = s + wdist_ref[h] * dist + kbias

    # --- online softmax with deferred normalization ---
    m_prev = m_scr[...]                                               # (tq, 1)
    m_new = jnp.maximum(m_prev, jnp.max(s, axis=-1, keepdims=True))
    alpha = jnp.exp(m_prev - m_new)                                   # (tq, 1)
    p = jnp.exp(s - m_new)                                            # (tq, tk) f32, unnormalized

    l_scr[...] = alpha * l_scr[...] + jnp.sum(p, axis=-1, keepdims=True)
    accv_scr[...] = alpha * accv_scr[...] + lax.dot_general(
        p.astype(jnp.bfloat16), v, (((1,), (0,)), ((), ())),
        preferred_element_type=jnp.float32)                           # (tq, Dh)
    # coordinate aggregation kept in f32 for type-1 precision
    accc_scr[...] = alpha * accc_scr[...] + lax.dot_general(
        p, ckT, (((1,), (1,)), ((), ())),
        preferred_element_type=jnp.float32)                           # (tq, 3)
    m_scr[...] = m_new

    @pl.when(ki == nk - 1)
    def _finalize_head():
        inv_l = pl.reciprocal(l_scr[...], approx=True)                # (tq, 1) f32
        mcol = mcol_ref[0]                                            # (tq, 1)
        o_h = (accv_scr[...] * inv_l).astype(jnp.bfloat16)            # (tq, Dh)
        # per-head output projection accumulated into the resident out0 block
        out0_ref[0] += mcol * jnp.dot(o_h, wo_ref[h],
                                      preferred_element_type=jnp.float32)
        # type-1: sum_j attn[i,j] (c_i - c_j) = c_i - (P @ c) / l ; padded rows zeroed
        out1_ref[0, h] = ((cq - accc_scr[...] * inv_l) * mcol).astype(out1_ref.dtype)


def spatial_nd_transformer_forward(feats, coords, params, mask=None):
    """Pallas implementation of SpatialNDTransformer.forward (single-degree core)."""
    B, N, D = feats.shape
    wq, wk, wv, wo, wdist = (params["wq"], params["wk"], params["wv"],
                             params["wo"], params["wdist"])
    H, _, Dh = wq.shape
    scale = 1.0 / (Dh ** 0.5)

    if mask is None:
        mask = jnp.ones((B, N), dtype=jnp.float32)
    mask = mask.astype(jnp.float32)

    # --- tile sizes: single tile for small N, 256-wide flash tiles otherwise.
    if N <= 256:
        n_pad = max(_round_up(N, 8), 8)
        tq = tk = n_pad
    else:
        tq = tk = 256
        n_pad = _round_up(N, 256)
    tm = tq
    pad = n_pad - N
    if pad:
        feats = jnp.pad(feats, ((0, 0), (0, pad), (0, 0)))
        coords = jnp.pad(coords, ((0, 0), (0, pad), (0, 0)))
        mask = jnp.pad(mask, ((0, 0), (0, pad)))          # padded tokens masked out

    feats32 = feats.astype(jnp.float32)
    coords32 = coords.astype(jnp.float32)
    coordsT = jnp.transpose(coords32, (0, 2, 1))          # (B, 3, n_pad)
    mask_row = mask.reshape(B, 1, n_pad)
    mask_col = mask.reshape(B, n_pad, 1)

    # --- weights: heads fused, softmax scale folded into Wq, bf16 once.
    def _fuse(w):                                         # (H, D, Dh) -> (D, H*Dh)
        return jnp.transpose(w, (1, 0, 2)).reshape(D, H * Dh)

    wqkv = jnp.concatenate([_fuse(wq) * scale, _fuse(wk), _fuse(wv)],
                           axis=-1).astype(jnp.bfloat16)              # (D, 3*H*Dh)
    wo_b = wo.astype(jnp.bfloat16)                                    # (H, Dh, D)
    wdist32 = wdist.astype(jnp.float32)

    # ---------------------------- call 1: fused QKV projection ---------------
    n_m = n_pad // tm
    qkv = pl.pallas_call(
        functools.partial(_qkv_proj_kernel, three_h=3 * H, dim_head=Dh),
        out_shape=jax.ShapeDtypeStruct((B, 3 * H, n_pad, Dh), jnp.bfloat16),
        grid=(B, n_m),
        in_specs=[
            pl.BlockSpec((1, tm, D), lambda b, m: (b, m, 0)),          # feats (bf16)
            pl.BlockSpec((D, 3 * H * Dh), lambda b, m: (0, 0)),        # Wqkv (grid-const)
        ],
        out_specs=pl.BlockSpec((1, 3 * H, tm, Dh), lambda b, m: (b, 0, m, 0)),
        compiler_params=pltpu.CompilerParams(
            dimension_semantics=("parallel", "parallel"),
            vmem_limit_bytes=48 * 1024 * 1024),
        cost_estimate=pl.CostEstimate(
            flops=int(2 * B * n_pad * D * 3 * H * Dh),
            transcendentals=0,
            bytes_accessed=int(2 * B * n_pad * D + 2 * D * 3 * H * Dh
                               + 2 * B * 3 * H * n_pad * Dh)),
    )(feats32.astype(jnp.bfloat16), wqkv)

    # ---------------------------- call 2: flash geometric attention ----------
    n_q = n_pad // tq
    n_k = n_pad // tk
    out0, out1 = pl.pallas_call(
        functools.partial(_flash_geom_attn_kernel, heads=H),
        out_shape=(
            jax.ShapeDtypeStruct((B, n_pad, D), jnp.float32),          # type-0
            jax.ShapeDtypeStruct((B, H, n_pad, 3), jnp.float32),       # type-1
        ),
        grid_spec=pltpu.PrefetchScalarGridSpec(
            num_scalar_prefetch=1,                                     # wdist -> SMEM
            grid=(B, n_q, H, n_k),
            in_specs=[
                pl.BlockSpec((1, 1, tq, Dh),
                             lambda b, qi, h, ki, wd: (b, h, qi, 0)),          # q
                pl.BlockSpec((1, 1, tk, Dh),
                             lambda b, qi, h, ki, wd: (b, H + h, ki, 0)),      # k
                pl.BlockSpec((1, 1, tk, Dh),
                             lambda b, qi, h, ki, wd: (b, 2 * H + h, ki, 0)),  # v
                pl.BlockSpec((1, tq, 3),
                             lambda b, qi, h, ki, wd: (b, qi, 0)),             # coords (q rows)
                pl.BlockSpec((1, 3, tk),
                             lambda b, qi, h, ki, wd: (b, 0, ki)),             # coords^T (k cols)
                pl.BlockSpec((1, 1, tk),
                             lambda b, qi, h, ki, wd: (b, 0, ki)),             # key mask (row)
                pl.BlockSpec((1, tq, 1),
                             lambda b, qi, h, ki, wd: (b, qi, 0)),             # query mask (col)
                pl.BlockSpec((1, tq, D),
                             lambda b, qi, h, ki, wd: (b, qi, 0)),             # feats (residual)
                pl.BlockSpec((H, Dh, D),
                             lambda b, qi, h, ki, wd: (0, 0, 0)),              # Wo (grid-const)
            ],
            out_specs=[
                pl.BlockSpec((1, tq, D), lambda b, qi, h, ki, wd: (b, qi, 0)),
                pl.BlockSpec((1, H, tq, 3), lambda b, qi, h, ki, wd: (b, 0, qi, 0)),
            ],
            scratch_shapes=[
                pltpu.VMEM((tq, 1), jnp.float32),     # running row-max
                pltpu.VMEM((tq, 1), jnp.float32),     # running denom
                pltpu.VMEM((tq, Dh), jnp.float32),    # running P @ V
                pltpu.VMEM((tq, 3), jnp.float32),     # running P @ coords
            ],
        ),
        compiler_params=pltpu.CompilerParams(
            dimension_semantics=("parallel", "parallel", "arbitrary", "arbitrary"),
            vmem_limit_bytes=48 * 1024 * 1024),
        cost_estimate=pl.CostEstimate(
            flops=int(B * H * (4 * n_pad * n_pad * Dh + 12 * n_pad * n_pad)
                      + 2 * B * n_pad * H * Dh * D),
            transcendentals=int(2 * B * H * n_pad * n_pad),
            bytes_accessed=int(2 * B * 3 * H * n_pad * Dh + 8 * B * n_pad * D
                               + 8 * B * n_pad * 3 + 8 * B * n_pad
                               + 2 * H * Dh * D + 4 * B * H * n_pad * 3)),
    )(wdist32, qkv, qkv, qkv, coords32, coordsT, mask_row, mask_col,
      feats32, wo_b)

    if pad:
        out0 = out0[:, :N, :]
        out1 = out1[:, :, :N, :]
    return out0, out1


def _reference_forward(feats, coords, params, mask):
    """Pure-JAX f32 reference of the same geometric-attention semantics."""
    wq, wk, wv, wo, wdist = (params["wq"], params["wk"], params["wv"],
                             params["wo"], params["wdist"])
    H, D, Dh = wq.shape
    scale = 1.0 / (Dh ** 0.5)
    q = jnp.einsum("bnd,hde->bhne", feats, wq) * scale
    k = jnp.einsum("bnd,hde->bhne", feats, wk)
    v = jnp.einsum("bnd,hde->bhne", feats, wv)
    diff = coords[:, :, None, :] - coords[:, None, :, :]
    dist = jnp.sqrt(jnp.maximum(jnp.sum(diff * diff, axis=-1), 0.0))   # (B,N,N)
    logits = jnp.einsum("bhie,bhje->bhij", q, k)
    logits = logits + wdist[None, :, None, None] * dist[:, None]
    logits = logits + jnp.where(mask[:, None, None, :] > 0.5, 0.0, -1e9)
    attn = jax.nn.softmax(logits, axis=-1)
    o = jnp.einsum("bhij,bhje->bhie", attn, v)
    o_proj = jnp.einsum("bhie,hed->bid", o, wo)
    type0 = feats + mask[..., None] * o_proj
    agg = jnp.einsum("bhij,bjc->bhic", attn, coords)
    type1 = (coords[:, None, :, :] - agg) * mask[:, None, :, None]
    return type0, type1


def init_params(key, dim, heads, dim_head):
    """Deterministic synthetic parameters (shapes implied by Equiformer(dim, heads, dim_head))."""
    k1, k2, k3, k4, k5 = jax.random.split(key, 5)
    s_in = 1.0 / (dim ** 0.5)
    s_out = 1.0 / (dim_head ** 0.5)
    return {
        "wq": jax.random.normal(k1, (heads, dim, dim_head), jnp.float32) * s_in,
        "wk": jax.random.normal(k2, (heads, dim, dim_head), jnp.float32) * s_in,
        "wv": jax.random.normal(k3, (heads, dim, dim_head), jnp.float32) * s_in,
        "wo": jax.random.normal(k4, (heads, dim_head, dim), jnp.float32) * s_out,
        "wdist": jax.random.normal(k5, (heads,), jnp.float32) * 0.1,
    }


if __name__ == "__main__":
    # Small shapes consistent with the module defaults:
    #   num_degrees=1, dim=32, dim_head=16, heads=2, seq=8, batch=2
    B, N, D, H, Dh = 2, 8, 32, 2, 16

    key = jax.random.PRNGKey(0)
    k_feat, k_coord, k_param = jax.random.split(key, 3)

    feats = jax.random.normal(k_feat, (B, N, D), jnp.float32)
    coords = jax.random.normal(k_coord, (B, N, 3), jnp.float32)
    mask = jnp.ones((B, N), jnp.float32).at[:, -1].set(0.0)   # last token padded

    params = init_params(k_param, D, H, Dh)

    type0, type1 = spatial_nd_transformer_forward(feats, coords, params, mask=mask)
    jax.block_until_ready((type0, type1))

    assert type0.shape == (B, N, D)
    assert type1.shape == (B, H, N, 3)
    assert bool(jnp.all(jnp.isfinite(type0))) and bool(jnp.all(jnp.isfinite(type1)))

    # loose check vs. the f32 reference (kernel uses bf16 MXU operands + approx recip)
    ref0, ref1 = _reference_forward(feats, coords, params, mask)
    err0 = float(jnp.max(jnp.abs(type0 - ref0)))
    err1 = float(jnp.max(jnp.abs(type1 - ref1)))
    assert err0 < 0.15 and err1 < 0.15, (err0, err1)

    print("KERNEL_OK")
</pallas_src>

<mosaic_0001>
module attributes {stable_mosaic.version = 11 : i64} {
  func.func @_qkv_proj_kernel(%arg0: i32, %arg1: i32, %arg2: memref<1x8x32xbf16, #tpu.memory_space<vmem>>, %arg3: memref<32x96xbf16, #tpu.memory_space<vmem>>, %arg4: memref<1x6x8x16xbf16, #tpu.memory_space<vmem>>) attributes {dimension_semantics = [#tpu.dimension_semantics<parallel>, #tpu.dimension_semantics<parallel>], iteration_bounds = array<i64: 2, 1>, scalar_prefetch = 0 : i64, scratch_operands = 0 : i64, tpu.core_type = #tpu.core_type<tc>, window_params = [{transform_indices = @transform_0, window_bounds = array<i64: 1, 8, 32>}, {pipeline_mode = #tpu.pipeline_mode<synchronous>, transform_indices = @transform_1, window_bounds = array<i64: 32, 96>}, {transform_indices = @transform_2, window_bounds = array<i64: 1, 6, 8, 16>}]} {
    %c0 = arith.constant 0 : index
    %c0_0 = arith.constant 0 : index
    %c0_1 = arith.constant 0 : index
    %0 = vector.load %arg2[%c0, %c0_0, %c0_1] : memref<1x8x32xbf16, #tpu.memory_space<vmem>>, vector<1x8x32xbf16>
    %1 = vector.shape_cast %0 : vector<1x8x32xbf16> to vector<8x32xbf16>
    %c0_2 = arith.constant 0 : index
    %c0_3 = arith.constant 0 : index
    %2 = vector.load %arg3[%c0_2, %c0_3] : memref<32x96xbf16, #tpu.memory_space<vmem>>, vector<32x96xbf16>
    %cst = arith.constant dense<0.000000e+00> : vector<8x96xf32>
    %3 = tpu.matmul %1, %2, %cst {dimension_numbers = #tpu.dot_dimension_numbers<[1], [0], [0], [1], [0, 0, 1, 1], [], []>} : vector<8x32xbf16>, vector<32x96xbf16>, vector<8x96xf32> -> vector<8x96xf32>
    %4 = arith.truncf %3 : vector<8x96xf32> to vector<8x96xbf16>
    %5 = vector.extract_strided_slice %4 {offsets = [0, 0], sizes = [8, 16], strides = [1, 1]} : vector<8x96xbf16> to vector<8x16xbf16>
    %c0_4 = arith.constant 0 : index
    %c0_5 = arith.constant 0 : index
    %c0_6 = arith.constant 0 : index
    %c0_7 = arith.constant 0 : index
    %6 = vector.load %arg4[%c0_4, %c0_5, %c0_6, %c0_7] : memref<1x6x8x16xbf16, #tpu.memory_space<vmem>>, vector<1x1x8x16xbf16>
    %7 = vector.shape_cast %6 : vector<1x1x8x16xbf16> to vector<8x16xbf16>
    %8 = vector.shape_cast %5 : vector<8x16xbf16> to vector<1x1x8x16xbf16>
    tpu.vector_store %arg4[%c0_4, %c0_5, %c0_6, %c0_7], %8 {strides = array<i32>} : memref<1x6x8x16xbf16, #tpu.memory_space<vmem>>, vector<1x1x8x16xbf16>,
    %9 = vector.extract_strided_slice %4 {offsets = [0, 16], sizes = [8, 16], strides = [1, 1]} : vector<8x96xbf16> to vector<8x16xbf16>
    %c0_8 = arith.constant 0 : index
    %c1 = arith.constant 1 : index
    %c0_9 = arith.constant 0 : index
    %c0_10 = arith.constant 0 : index
    %10 = vector.load %arg4[%c0_8, %c1, %c0_9, %c0_10] : memref<1x6x8x16xbf16, #tpu.memory_space<vmem>>, vector<1x1x8x16xbf16>
    %11 = vector.shape_cast %10 : vector<1x1x8x16xbf16> to vector<8x16xbf16>
    %12 = vector.shape_cast %9 : vector<8x16xbf16> to vector<1x1x8x16xbf16>
    tpu.vector_store %arg4[%c0_8, %c1, %c0_9, %c0_10], %12 {strides = array<i32>} : memref<1x6x8x16xbf16, #tpu.memory_space<vmem>>, vector<1x1x8x16xbf16>,
    %13 = vector.extract_strided_slice %4 {offsets = [0, 32], sizes = [8, 16], strides = [1, 1]} : vector<8x96xbf16> to vector<8x16xbf16>
    %c0_11 = arith.constant 0 : index
    %c2 = arith.constant 2 : index
    %c0_12 = arith.constant 0 : index
    %c0_13 = arith.constant 0 : index
    %14 = vector.load %arg4[%c0_11, %c2, %c0_12, %c0_13] : memref<1x6x8x16xbf16, #tpu.memory_space<vmem>>, vector<1x1x8x16xbf16>
    %15 = vector.shape_cast %14 : vector<1x1x8x16xbf16> to vector<8x16xbf16>
    %16 = vector.shape_cast %13 : vector<8x16xbf16> to vector<1x1x8x16xbf16>
    tpu.vector_store %arg4[%c0_11, %c2, %c0_12, %c0_13], %16 {strides = array<i32>} : memref<1x6x8x16xbf16, #tpu.memory_space<vmem>>, vector<1x1x8x16xbf16>,
    %17 = vector.extract_strided_slice %4 {offsets = [0, 48], sizes = [8, 16], strides = [1, 1]} : vector<8x96xbf16> to vector<8x16xbf16>
    %c0_14 = arith.constant 0 : index
    %c3 = arith.constant 3 : index
    %c0_15 = arith.constant 0 : index
    %c0_16 = arith.constant 0 : index
    %18 = vector.load %arg4[%c0_14, %c3, %c0_15, %c0_16] : memref<1x6x8x16xbf16, #tpu.memory_space<vmem>>, vector<1x1x8x16xbf16>
    %19 = vector.shape_cast %18 : vector<1x1x8x16xbf16> to vector<8x16xbf16>
    %20 = vector.shape_cast %17 : vector<8x16xbf16> to vector<1x1x8x16xbf16>
    tpu.vector_store %arg4[%c0_14, %c3, %c0_15, %c0_16], %20 {strides = array<i32>} : memref<1x6x8x16xbf16, #tpu.memory_space<vmem>>, vector<1x1x8x16xbf16>,
    %21 = vector.extract_strided_slice %4 {offsets = [0, 64], sizes = [8, 16], strides = [1, 1]} : vector<8x96xbf16> to vector<8x16xbf16>
    %c0_17 = arith.constant 0 : index
    %c4 = arith.constant 4 : index
    %c0_18 = arith.constant 0 : index
    %c0_19 = arith.constant 0 : index
    %22 = vector.load %arg4[%c0_17, %c4, %c0_18, %c0_19] : memref<1x6x8x16xbf16, #tpu.memory_space<vmem>>, vector<1x1x8x16xbf16>
    %23 = vector.shape_cast %22 : vector<1x1x8x16xbf16> to vector<8x16xbf16>
    %24 = vector.shape_cast %21 : vector<8x16xbf16> to vector<1x1x8x16xbf16>
    tpu.vector_store %arg4[%c0_17, %c4, %c0_18, %c0_19], %24 {strides = array<i32>} : memref<1x6x8x16xbf16, #tpu.memory_space<vmem>>, vector<1x1x8x16xbf16>,
    %25 = vector.extract_strided_slice %4 {offsets = [0, 80], sizes = [8, 16], strides = [1, 1]} : vector<8x96xbf16> to vector<8x16xbf16>
    %c0_20 = arith.constant 0 : index
    %c5 = arith.constant 5 : index
    %c0_21 = arith.constant 0 : index
    %c0_22 = arith.constant 0 : index
    %26 = vector.load %arg4[%c0_20, %c5, %c0_21, %c0_22] : memref<1x6x8x16xbf16, #tpu.memory_space<vmem>>, vector<1x1x8x16xbf16>
    %27 = vector.shape_cast %26 : vector<1x1x8x16xbf16> to vector<8x16xbf16>
    %28 = vector.shape_cast %25 : vector<8x16xbf16> to vector<1x1x8x16xbf16>
    tpu.vector_store %arg4[%c0_20, %c5, %c0_21, %c0_22], %28 {strides = array<i32>} : memref<1x6x8x16xbf16, #tpu.memory_space<vmem>>, vector<1x1x8x16xbf16>,
    return
  }
  func.func @transform_0(%arg0: i32, %arg1: i32) -> (i32, i32, i32) {
    %c0_i32 = arith.constant 0 : i32
    %c0_i32_0 = arith.constant 0 : i32
    return %arg0, %arg1, %c0_i32 : i32, i32, i32
  }
  func.func @transform_1(%arg0: i32, %arg1: i32) -> (i32, i32) {
    %c0_i32 = arith.constant 0 : i32
    %c0_i32_0 = arith.constant 0 : i32
    %c0_i32_1 = arith.constant 0 : i32
    return %c0_i32, %c0_i32_0 : i32, i32
  }
  func.func @transform_2(%arg0: i32, %arg1: i32) -> (i32, i32, i32, i32) {
    %c0_i32 = arith.constant 0 : i32
    %c0_i32_0 = arith.constant 0 : i32
    %c0_i32_1 = arith.constant 0 : i32
    return %arg0, %c0_i32, %arg1, %c0_i32_0 : i32, i32, i32, i32
  }
}

</mosaic_0001>

<llo_original>
// kernel: tpu_custom_call.1
$region0: #{tpu_custom_call.1}
  #allocation0 [shape = 'u32[]', space=smem, size = 0x4, offset = 0x4, fixed_abs, tag = 'smem constant byte address 0x4 - core index']
  #allocation1 [shape = 'u32[144,128]{1,0:T(1,128)}', space=vmem, size = 0x12000, scoped, tag = 'internal scratch']
  %s0 = inlined_call_operand.hbm [shape: bf16[2,8,32], index: 0, kind: input, shape index: {}]
  %s1 = inlined_call_operand.hbm [shape: bf16[32,96], index: 1, kind: input, shape index: {}]
  %s2 = inlined_call_operand.hbm [shape: bf16[2,6,8,16], index: 2, kind: output, shape index: {}]
  %s3 = sld [smem:[#allocation0]]
  $region49: #{tpu_custom_call.1} parent=0
    _
  %s5 = ssub.s32 1, %s3
  %s6 = scalar_select 0, %s5, %s3
  $region1: #{tpu_custom_call.1} parent=0
    #allocation2 [shape = 'u8[4096]{0}', space=vmem, size = 0x1000, scoped, tag = 'input window, operand 0']
    #allocation3 [shape = 's32[2]{0}', space=sflag, size = 0x8, scoped, tag = 'scoped memory for tpu_custom_call.1']
    #allocation4 [shape = 's32[2]{0}', space=sflag, size = 0x8, scoped, tag = 'scoped memory for tpu_custom_call.1']
    #allocation5 [shape = 'u8[8192]{0}', space=vmem, size = 0x2000, scoped, tag = 'input window, operand 1, single buffered']
    #allocation6 [shape = 's32[1]{0}', space=sflag, size = 0x4, scoped, tag = 'scoped memory for tpu_custom_call.1']
    #allocation7 [shape = 'u8[24576]{0}', space=vmem, size = 0x6000, scoped, tag = 'output window, operand 0']
    %7 = vsyncpa [#allocation3], 0
    %s8 = scalar_lea.sflag [#allocation3], 1
    %9 = vsyncpa %s8, 0
    %10 = vsyncpa [#allocation6], 0
    %11 = vsyncpa [#allocation4], 0
    %s12 = scalar_lea.sflag [#allocation4], 1
    %13 = vsyncpa %s12, 0
    loop: start=0, step=1, limit=4
    $region2: #{tpu_custom_call.1} parent=1 // loop_pre_header
      _
    $region3: #{tpu_custom_call.1} parent=1 // loop_header
      %s15 = sphi 0, %s19
      %p16 = scmp.ge.s32.totalorder %s15, 4
      %s22 = sphi 0, %s34
      %s23 = sphi 0, %s30
      %s24 = sphi 0, %s22
      %s25 = sphi 0, %s23
      %s26 = sphi 0, %s24
      %s27 = sphi 0, %s25
      %s39 = sphi 0, %s41
      %s42 = sphi 0, %s39
      %s43 = sphi 0, %s42
      %s59 = sphi 0, %s43
      %s63 = sphi 0, %s63
      %s65 = sphi 0, %s63
      %s66 = sphi 0, %s65
      %s80 = sphi 0, %s66
      %s88 = sphi 0, %s90
      %s91 = sphi 0, %s88
      %s92 = sphi 0, %s91
      %s108 = sphi 0, %s92
    $region4: #{tpu_custom_call.1} parent=1 // loop_header_branch
      %18 = sbr.rel (%p16) target = $region8
    $region5: #{tpu_custom_call.1} parent=1 // loop_body
      %s20 = ssub.s32 %s15, 1
      %s21 = ssub.s32 %s15, 2
      %s28 = sadd.s32 1, %s23
      %p29 = scmp.ge.s32.totalorder %s28, 1
      %s30 = scalar_select %p29, 0, %s28
      %s31 = sadd.s32 1, %s22
      %s32 = scalar_select %p29, %s31, %s22
      %p33 = scmp.ge.s32.totalorder %s32, 2
      %s34 = scalar_select %p33, 0, %s32
      %s35 = ssub.s32 %s22, %s34
      %s36 = ssub.s32 %s23, %s30
      %s37 = sor.u32 %s35, %s36
      %p38 = scmp.eq.s32.totalorder %s37, 0
      %s40 = sadd.s32 %s39, 1
      %s41 = scalar_select %p38, %s39, %s40
      %p44 = pneg %p38
      %p45 = scmp.eq.s32.totalorder %s15, 1
      %p46 = por %p44, %p45
      %p47 = scmp.ne.s32.totalorder %s39, %s42
      %p48 = scmp.eq.s32.totalorder %s15, 0
      %p49 = por %p47, %p48
      %p50 = scmp.ne.s32.totalorder %s39, %s42
      %p51 = scmp.eq.s32.totalorder %s20, 1
      %p52 = por %p50, %p51
      %p53 = scmp.ne.s32.totalorder %s42, %s43
      %p54 = scmp.eq.s32.totalorder %s20, 0
      %p55 = por %p53, %p54
      %p56 = scmp.ne.s32.totalorder %s42, %s43
      %p57 = scmp.eq.s32.totalorder %s21, 1
      %p58 = por %p56, %p57
      %p60 = scmp.ne.s32.totalorder %s43, %s59
      %p61 = scmp.eq.s32.totalorder %s21, 0
      %p62 = por %p60, %p61
      %s64 = sadd.s32 %s63, 1
      %p67 = scmp.eq.s32.totalorder %s15, 1
      %p68 = scmp.ne.s32.totalorder %s63, %s65
      %p69 = scmp.eq.s32.totalorder %s15, 0
      %p70 = por %p68, %p69
      %p71 = scmp.ne.s32.totalorder %s63, %s65
      %p72 = scmp.eq.s32.totalorder %s20, 1
      %p73 = por %p71, %p72
      %p74 = scmp.ne.s32.totalorder %s65, %s66
      %p75 = scmp.eq.s32.totalorder %s20, 0
      %p76 = por %p74, %p75
      %p77 = scmp.ne.s32.totalorder %s65, %s66
      %p78 = scmp.eq.s32.totalorder %s21, 1
      %p79 = por %p77, %p78
      %p81 = scmp.ne.s32.totalorder %s66, %s80
      %p82 = scmp.eq.s32.totalorder %s21, 0
      %p83 = por %p81, %p82
      %s84 = ssub.s32 %s22, %s34
      %s85 = ssub.s32 %s23, %s30
      %s86 = sor.u32 %s84, %s85
      %p87 = scmp.eq.s32.totalorder %s86, 0
      %s89 = sadd.s32 %s88, 1
      %s90 = scalar_select %p87, %s88, %s89
      %p93 = pneg %p87
      %p94 = scmp.eq.s32.totalorder %s15, 1
      %p95 = por %p93, %p94
      %p96 = scmp.ne.s32.totalorder %s88, %s91
      %p97 = scmp.eq.s32.totalorder %s15, 0
      %p98 = por %p96, %p97
      %p99 = scmp.ne.s32.totalorder %s88, %s91
      %p100 = scmp.eq.s32.totalorder %s20, 1
      %p101 = por %p99, %p100
      %p102 = scmp.ne.s32.totalorder %s91, %s92
      %p103 = scmp.eq.s32.totalorder %s20, 0
      %p104 = por %p102, %p103
      %p105 = scmp.ne.s32.totalorder %s91, %s92
      %p106 = scmp.eq.s32.totalorder %s21, 1
      %p107 = por %p105, %p106
      %p109 = scmp.ne.s32.totalorder %s92, %s108
      %p110 = scmp.eq.s32.totalorder %s21, 0
      %p111 = por %p109, %p110
      %p112 = scmp.le.s32.totalorder 1, %s15
      %p113 = scmp.lt.s32.totalorder %s15, 3
      %p114 = pnand %p112, %p113
      %p115 = pneg %p114
      // Predicated region
      $region9: #{tpu_custom_call.1} parent=5 // pred_check
        _
      $region10: #{tpu_custom_call.1} parent=5 // pred_check_branch
        %117 = sbr.rel (%p114) target = $region12
      $region11: #{tpu_custom_call.1} parent=5 // pred_region
        %s118 = ssub.s32 %s15, 1
        // Predicated region
        $region13: #{tpu_custom_call.1} parent=11 // pred_check
          %p119 = pneg %p76
        $region14: #{tpu_custom_call.1} parent=11 // pred_check_branch
          %121 = sbr.rel (%p119) target = $region16
        $region15: #{tpu_custom_call.1} parent=11 // pred_region
          %s123 = ssub.s32 256, 256
          %124 = vsyncadd [#allocation6], %s123
          %s125 = sshll.u32 [#allocation5], 4
          %s126 = int_to_ptr.vmem [resolvable:$true] %s125
          %131 = dma.hbm_to_vmem [thread:$0]  %s1, 256, %s126, [#allocation6], 64, 64, 4
        $region16: #{tpu_custom_call.1} parent=11 // pred_fallthru
          _
      $region12: #{tpu_custom_call.1} parent=5 // pred_fallthru
        _
      %p132 = scmp.lt.s32.totalorder %s15, 2
      // Predicated region
      $region17: #{tpu_custom_call.1} parent=5 // pred_check
        %p133 = pneg %p132
      $region18: #{tpu_custom_call.1} parent=5 // pred_check_branch
        %135 = sbr.rel (%p133) target = $region20
      $region19: #{tpu_custom_call.1} parent=5 // pred_region
        // Predicated region
        $region21: #{tpu_custom_call.1} parent=19 // pred_check
          %p136 = pneg %p49
        $region22: #{tpu_custom_call.1} parent=19 // pred_check_branch
          %138 = sbr.rel (%p136) target = $region24
        $region23: #{tpu_custom_call.1} parent=19 // pred_region
          %s139 = sand.u32 %s39, 1
          %s140 = scalar_lea.sflag [#allocation3], %s139
          %s141 = sand.u32 %s39, 1
          %s142 = smul.addr %s141, 4
          %s143 = scalar_lea.vmem [#allocation2], %s142
          %s145 = ssub.s32 64, 64
          %146 = vsyncadd %s140, %s145
          %s147 = sadd.s32 %s23, %s22
          %s148 = smul.addr %s147, 64
          %s149 = scalar_lea.hbm %s0, %s148
          %s151 = sshll.u32 %s143, 4
          %s152 = int_to_ptr.vmem [resolvable:$true] %s151
          %154 = dma.hbm_to_vmem [thread:$0]  %s149, 64, %s152, %s140
        $region24: #{tpu_custom_call.1} parent=19 // pred_fallthru
          _
      $region20: #{tpu_custom_call.1} parent=5 // pred_fallthru
        _
      %p155 = scmp.le.s32.totalorder 1, %s15
      %p156 = scmp.lt.s32.totalorder %s15, 3
      %p157 = pnand %p155, %p156
      %p158 = pneg %p157
      // Predicated region
      $region25: #{tpu_custom_call.1} parent=5 // pred_check
        _
      $region26: #{tpu_custom_call.1} parent=5 // pred_check_branch
        %160 = sbr.rel (%p157) target = $region28
      $region27: #{tpu_custom_call.1} parent=5 // pred_region
        %s161 = ssub.s32 %s15, 1
        %s162 = sand.u32 %s42, 1
        %s163 = scalar_lea.sflag [#allocation3], %s162
        %s164 = sand.u32 %s42, 1
        %s165 = smul.addr %s164, 4
        %s166 = scalar_lea.vmem [#allocation2], %s165
        // Predicated region
        $region29: #{tpu_custom_call.1} parent=27 // pred_check
          %p167 = pneg %p55
        $region30: #{tpu_custom_call.1} parent=27 // pred_check_branch
          %169 = sbr.rel (%p167) target = $region32
        $region31: #{tpu_custom_call.1} parent=27 // pred_region
          %170 = dma.done %s163, 64
        $region32: #{tpu_custom_call.1} parent=27 // pred_fallthru
          _
        // Predicated region
        $region33: #{tpu_custom_call.1} parent=27 // pred_check
          %p171 = pneg %p76
        $region34: #{tpu_custom_call.1} parent=27 // pred_check_branch
          %173 = sbr.rel (%p171) target = $region36
        $region35: #{tpu_custom_call.1} parent=27 // pred_region
          %174 = dma.done [#allocation6], 256
        $region36: #{tpu_custom_call.1} parent=27 // pred_fallthru
          _
        %s175 = sand.u32 %s42, 1
        %s176 = scalar_lea.sflag [#allocation3], %s175
        %s177 = sand.u32 %s42, 1
        %s178 = smul.addr %s177, 4
        %s179 = scalar_lea.vmem [#allocation2], %s178
        %p180 = pneg %p55
        %p181 = pneg %p52
        %p182 = pneg %p76
        %p183 = pneg %p73
        %p184 = pneg %p104
        %p185 = pneg %p101
        %s186 = sand.u32 %s91, 1
        %s187 = scalar_lea.sflag [#allocation4], %s186
        %s188 = sand.u32 %s91, 1
        %s189 = smul.addr %s188, 24
        %s190 = scalar_lea.vmem [#allocation7], %s189
        %v192 = vld [vmem:[%s166] sm:$0xf]
        %v193 = vld [vmem:[#allocation5] sm:$0xf]
        %v194 = vld [vmem:[#allocation5 + $0x4] sm:$0xf]
        %v195 = vld [vmem:[#allocation5 + $0x8] sm:$0xf]
        %v196 = vld [vmem:[#allocation5 + $0xc] sm:$0xf]
        %v201 = vunpack.c.l.b16 %v193
        %v202 = vunpack.c.l.b16 %v194
        %v203 = vunpack.c.l.b16 %v195
        %v204 = vunpack.c.l.b16 %v196
        %v205 = vpack.c.b16 %v202, %v201
        %v206 = vpack.c.b16 %v204, %v203
        %vm209 = vcmask 261120
        %v211 = vsel %vm209, %v192, 0
        %213 = vmatprep.subr.bf16.mxu0 0
        %214 = vmatpush1.bf16.msra.mxu0 0
        %215 = vmatprep.subr.bf16.mxu0 0
        %216 = vmatpush1.bf16.msra.mxu0 0
        %217 = vmatprep.subr.bf16.mxu0 0
        %218 = vmatpush1.bf16.msra.mxu0 0
        %219 = vmatprep.subr.bf16.mxu0 0
        %220 = vmatpush1.bf16.msra.mxu0 0
        %221 = vmatprep.subr.bf16.mxu0 0
        %222 = vmatpush1.bf16.msra.mxu0 0
        %223 = vmatprep.subr.bf16.mxu0 0
        %224 = vmatpush1.bf16.msra.mxu0 0
        %225 = vmatprep.subr.bf16.mxu0 0
        %226 = vmatpush1.bf16.msra.mxu0 %v206
        %227 = vmatprep.subr.bf16.mxu0 0
        %228 = vmatpush1.bf16.msra.mxu0 %v205
        %229 = vmatprep.subr.bf16.mxu0 0
        %230 = vmatpush2.bf16.msra.mxu0 0
        %231 = vmatprep.subr.bf16.mxu0 0
        %232 = vmatpush2.bf16.msra.mxu0 0
        %233 = vmatprep.subr.bf16.mxu0 0
        %234 = vmatpush2.bf16.msra.mxu0 0
        %235 = vmatprep.subr.bf16.mxu0 0
        %236 = vmatpush2.bf16.msra.mxu0 0
        %237 = vmatprep.subr.bf16.mxu0 0
        %238 = vmatpush2.bf16.msra.mxu0 0
        %239 = vmatprep.subr.bf16.mxu0 0
        %240 = vmatpush2.bf16.msra.mxu0 0
        %241 = vmatprep.subr.bf16.mxu0 0
        %242 = vmatpush2.bf16.msra.mxu0 0
        %243 = vmatprep.subr.bf16.mxu0 0
        %244 = vmatpush2.bf16.msra.mxu0 0
        %245 = vmatprep.mubr.bf16.mxu0 0
        %246 = vmatmul.mubr.bf16.gmra.mxu0 %v211
        %v247 = vpop.f32.mrf.mxu0
        %v248 = vadd.f32 0.0, %v247
        %v249 = vpop.f32.mrf.mxu0
        %v250 = vpop.f32.mrf.mxu0
        %v251 = vpop.f32.mrf.mxu0
        %252 = vdwg.mxu0
        %v253 = vpack.c.bf16 %v248, %v248
        %vm254 = vcmask 125952
        %255 = vst.msk [vmem:[%s190] sm:$0xf] %vm254, %v253
        %v257 = vunpack.c.l.b16 %v253
        %v258 = vpack.c.b16 %v257, %v257
        %259 = vrot.lane.b32.xlu0 %v258, 112
        %v260 = vpop.permute.xlu0 %259
        %s262 = scalar_lea.vmem %s190, 4 [#allocation7]
        %263 = vst.msk [vmem:[%s262] sm:$0xf] %vm254, %v260
        %264 = vrot.lane.b32.xlu0 %v258, 96
        %v265 = vpop.permute.xlu0 %264
        %s267 = scalar_lea.vmem %s190, 8 [#allocation7]
        %268 = vst.msk [vmem:[%s267] sm:$0xf] %vm254, %v265
        %269 = vrot.lane.b32.xlu0 %v258, 80
        %v270 = vpop.permute.xlu0 %269
        %s272 = scalar_lea.vmem %s190, 12 [#allocation7]
        %273 = vst.msk [vmem:[%s272] sm:$0xf] %vm254, %v270
        %274 = vrot.lane.b32.xlu0 %v258, 64
        %v275 = vpop.permute.xlu0 %274
        %s277 = scalar_lea.vmem %s190, 16 [#allocation7]
        %278 = vst.msk [vmem:[%s277] sm:$0xf] %vm254, %v275
        %279 = vrot.lane.b32.xlu0 %v258, 48
        %v280 = vpop.permute.xlu0 %279
        %s282 = scalar_lea.vmem %s190, 20 [#allocation7]
        %283 = vst.msk [vmem:[%s282] sm:$0xf] %vm254, %v280
        %s284 = sand.u32 %s91, 1
        %s285 = scalar_lea.sflag [#allocation4], %s284
        %s286 = sand.u32 %s91, 1
        %s287 = smul.addr %s286, 24
        %s288 = scalar_lea.vmem [#allocation7], %s287
        // Predicated region
        $region37: #{tpu_custom_call.1} parent=27 // pred_check
          %p289 = pneg %p101
        $region38: #{tpu_custom_call.1} parent=27 // pred_check_branch
          %291 = sbr.rel (%p289) target = $region40
        $region39: #{tpu_custom_call.1} parent=27 // pred_region
          %s293 = ssub.s32 384, 384
          %294 = vsyncadd %s285, %s293
          %s295 = smul.addr %s24, 6
          %s296 = sadd.s32 %s25, %s295
          %s297 = smul.addr %s296, 64
          %s298 = scalar_lea.hbm %s2, %s297
          %s299 = sshll.u32 %s288, 4
          %s300 = int_to_ptr.vmem [resolvable:$true] %s299
          %305 = dma.vmem_to_hbm [thread:$0]  %s300, 384, %s298, %s285, 64, 64, 4
        $region40: #{tpu_custom_call.1} parent=27 // pred_fallthru
          _
      $region28: #{tpu_custom_call.1} parent=5 // pred_fallthru
        _
      %p306 = scmp.le.s32.totalorder 2, %s15
      // Predicated region
      $region41: #{tpu_custom_call.1} parent=5 // pred_check
        %p307 = pneg %p306
      $region42: #{tpu_custom_call.1} parent=5 // pred_check_branch
        %309 = sbr.rel (%p307) target = $region44
      $region43: #{tpu_custom_call.1} parent=5 // pred_region
        %s310 = ssub.s32 %s15, 2
        // Predicated region
        $region45: #{tpu_custom_call.1} parent=43 // pred_check
          %p311 = pneg %p107
        $region46: #{tpu_custom_call.1} parent=43 // pred_check_branch
          %313 = sbr.rel (%p311) target = $region48
        $region47: #{tpu_custom_call.1} parent=43 // pred_region
          %s314 = sand.u32 %s92, 1
          %s315 = scalar_lea.sflag [#allocation4], %s314
          %s316 = sand.u32 %s92, 1
          %s317 = smul.addr %s316, 24
          %s318 = scalar_lea.vmem [#allocation7], %s317
          %319 = dma.done %s315, 384
        $region48: #{tpu_custom_call.1} parent=43 // pred_fallthru
          _
      $region44: #{tpu_custom_call.1} parent=5 // pred_fallthru
        _
    $region6: #{tpu_custom_call.1} parent=1 // loop_footer
      %s19 = sadd.s32 1, %s15
    $region7: #{tpu_custom_call.1} parent=1 // loop_footer_branch
      %14 = sbr.rel target = $region3
    $region8: #{tpu_custom_call.1} parent=1 // loop_exit
      _
    %320 = vsyncpa [#allocation3], 1
    %s321 = scalar_lea.sflag [#allocation3], 1
    %322 = vsyncpa %s321, 1
    %323 = vsyncpa [#allocation6], 1
    %324 = vsyncpa [#allocation4], 1
    %s325 = scalar_lea.sflag [#allocation4], 1
    %326 = vsyncpa %s325, 1

</llo_original>
